<compile_context>
chip_gen: v6e
topology: v6e:2x2x1
jax: 0.10.0
libtpu: 0.0.40
codegen_flags: <defaults>
</compile_context>

<pallas_src>
import jax
import jax.numpy as jnp
from jax.experimental import pallas as pl
from jax.experimental.pallas import tpu as pltpu

_LANE = 128


# ------------------------------ fused kernel ----------------------------------
def fused_wect_mlp_kernel(
    x_ref,      # (bb*N, d)    node coordinates for this batch block
    wbd_ref,    # (bb, bb*N)   host-built block-diagonal 0.5*weights
    wsum_ref,   # (bb, 1)      0.5 * sum_n w[i, n]
    vs_ref,     # (d, T*D)     -0.5*scale * directions, tiled T times along lanes
    lin_ref,    # (1, T*D)     0.5*scale * thresholds, each repeated D times
    w1_ref,     # (T*D, Hp)    fc1 weight (in x out), H padded to 128 lanes
    b1_ref,     # (1, Hp)
    w2_ref,     # (Hp, Cp)     fc2 weight (in x out), C padded to 128 lanes
    b2_ref,     # (1, Cp)
    o_ref,      # (bb, Cp)     logits (padded), lane-dense output block
):
    d = vs_ref.shape[0]

    # t = 0.5 * scale * (threshold - <x, v>); scale/sign/0.5 folded on host.
    # d is tiny (2), so per-coordinate VPU FMAs beat a depth-2 MXU matmul.
    t = x_ref[:, 0:1] * vs_ref[0:1, :]
    for j in range(1, d):
        t = t + x_ref[:, j : j + 1] * vs_ref[j : j + 1, :]
    t = t + lin_ref[...]                               # (bb*N, T*D)

    # sigmoid(z) = 0.5*tanh(z/2) + 0.5 -> single EUP op per element; the affine
    # part is absorbed into the 0.5-scaled block-diag weights + wsum term.
    th = jnp.tanh(t)

    # Weighted node reduction as one MXU matmul with a constant-per-step DMA'd
    # block-diagonal operand (no in-kernel mask construction).
    feat = (
        jnp.dot(wbd_ref[...], th, preferred_element_type=jnp.float32)
        + wsum_ref[...]
    )                                                  # (bb, T*D), T-major flatten

    # Fused MLP head: fc1 + ReLU + fc2 (all operands lane-dense / padded).
    h = jnp.dot(feat, w1_ref[...], preferred_element_type=jnp.float32) + b1_ref[...]
    h = jnp.maximum(h, 0.0)
    o_ref[...] = (
        jnp.dot(h, w2_ref[...], preferred_element_type=jnp.float32) + b2_ref[...]
    )


# ------------------------------ helpers ---------------------------------------
def _tensorcore_count():
    """TensorCores sharing a 'parallel' grid axis (2 on v7x, 1 on v5e/v6e)."""
    try:
        kind = jax.devices()[0].device_kind.lower()
    except Exception:
        return 1
    return 2 if "v7" in kind else 1


def _pick_batch_block(B, N, TD, num_cores):
    def ok(bb):
        if B % bb:
            return False
        # Mosaic block rule: sublane dims must be multiples of 8 unless the
        # block spans the full array extent along that dim.
        if bb != B and (bb % 8 or (bb * N) % 8):
            return False
        # Keep live f32 intermediates (t/tanh (bb*N,TD), double-buffered x and
        # block-diag tiles) well inside v7x's 64 MiB VMEM (<= ~24 MiB budget).
        live = 4 * (3 * bb * N * TD + 2 * bb * N * _LANE + 2 * bb * bb * N)
        return live <= 24 * 1024 * 1024

    cands = [bb for bb in range(1, B + 1) if ok(bb)]
    if num_cores <= 1:
        return max(cands)        # single TC: biggest block; a 1-step grid is fine
    balanced = [bb for bb in cands if (B // bb) % num_cores == 0]
    return max(balanced) if balanced else max(cands)


def _pad_to_lane(a, axes):
    """Zero-pad the given axes of `a` up to multiples of the 128-lane width."""
    pads = [(0, 0)] * a.ndim
    for ax in axes:
        size = a.shape[ax]
        padded = -(-size // _LANE) * _LANE
        pads[ax] = (0, padded - size)
    return jnp.pad(a, pads)


# ------------------------------ full classifier -------------------------------
def wect_classifier(x, node_w, v, lin, scale, w1, b1, w2, b2, *, batch_block=None):
    B, N, d = x.shape
    D = v.shape[1]
    T = int(lin.reshape(-1).shape[0])
    TD = T * D
    H = w1.shape[1]
    C = w2.shape[1]
    assert w1.shape[0] == TD, "fc1 in-features must be num_directions * bump_steps"

    bb = (
        _pick_batch_block(B, N, TD, _tensorcore_count())
        if batch_block is None
        else batch_block
    )
    assert B % bb == 0
    G = B // bb

    scale = jnp.float32(scale)
    x_flat = x.reshape(B * N, d).astype(jnp.float32)

    # Fold scale, the minus sign and tanh's 1/2 into the host constants.
    lin_row = (
        jnp.repeat(lin.reshape(T).astype(jnp.float32), D).reshape(1, TD)
        * (0.5 * scale)
    )                                                   # lin_row[0, t*D+k] = s/2*lin[t]
    vs = jnp.tile(v.astype(jnp.float32), (1, T)) * (-0.5 * scale)   # vs[:, t*D+k]

    # Host-built block-diagonal weights (pre-scaled by 0.5 for the tanh form)
    # plus the per-sample 0.5*sum(w) correction term.
    w2d = node_w.reshape(B, N).astype(jnp.float32)
    eye = jnp.eye(bb, dtype=jnp.float32)
    wbd = (0.5 * w2d.reshape(G, bb, 1, N) * eye[None, :, :, None]).reshape(B, bb * N)
    wsum = 0.5 * jnp.sum(w2d, axis=1, keepdims=True)    # (B, 1)

    # Pad FC dims to full lane width so every matmul / store is lane-dense.
    w1p = _pad_to_lane(w1.astype(jnp.float32), (1,))                   # (TD, Hp)
    b1p = _pad_to_lane(b1.reshape(1, H).astype(jnp.float32), (1,))     # (1, Hp)
    w2p = _pad_to_lane(w2.astype(jnp.float32), (0, 1))                 # (Hp, Cp)
    b2p = _pad_to_lane(b2.reshape(1, C).astype(jnp.float32), (1,))     # (1, Cp)
    Hp, Cp = w2p.shape

    out = pl.pallas_call(
        fused_wect_mlp_kernel,
        out_shape=jax.ShapeDtypeStruct((B, Cp), jnp.float32),
        grid=(G,),
        in_specs=[
            pl.BlockSpec((bb * N, d), lambda b: (b, 0)),
            pl.BlockSpec((bb, bb * N), lambda b: (b, 0)),
            pl.BlockSpec((bb, 1), lambda b: (b, 0)),
            pl.BlockSpec((d, TD), lambda b: (0, 0)),
            pl.BlockSpec((1, TD), lambda b: (0, 0)),
            pl.BlockSpec((TD, Hp), lambda b: (0, 0)),
            pl.BlockSpec((1, Hp), lambda b: (0, 0)),
            pl.BlockSpec((Hp, Cp), lambda b: (0, 0)),
            pl.BlockSpec((1, Cp), lambda b: (0, 0)),
        ],
        out_specs=pl.BlockSpec((bb, Cp), lambda b: (b, 0)),
        compiler_params=pltpu.CompilerParams(
            dimension_semantics=("parallel",),
            vmem_limit_bytes=32 * 1024 * 1024,
        ),
    )(x_flat, wbd, wsum, vs, lin_row, w1p, b1p, w2p, b2p)

    return out[:, :C]                                   # (B, num_classes)


# ------------------------------ pure-JAX reference -----------------------------
def ref_classifier(x, w, v, lin, scale, w1, b1, w2, b2):
    nh = jnp.einsum("bnd,dk->bnk", x, v)                            # (B, N, D)
    ecc = jax.nn.sigmoid(scale * (lin[None, :, None, None] - nh[:, None, :, :]))
    wect = jnp.einsum("bn,btnk->btk", w[:, :, 0], ecc)              # (B, T, D)
    feat = wect.reshape(x.shape[0], -1)                             # T-major flatten
    h = jnp.maximum(feat @ w1 + b1, 0.0)
    return h @ w2 + b2


if __name__ == "__main__":
    # Small config consistent with the module: fc1 in-dim = num_directions * bump_steps.
    B, N, d = 2, 16, 2          # batch, nodes per sample, coordinate dim
    D, T = 16, 8                # num_directions, bump_steps  -> T*D = 128 lanes
    HIDDEN, NUM_CLASSES = 32, 4
    SCALE = 8.0                 # sigmoid sharpness of the WECT bump
    RADIUS = 1.5

    key = jax.random.PRNGKey(0)
    kx, kw, k1, k2, kb1, kb2 = jax.random.split(key, 6)

    x = jax.random.normal(kx, (B, N, d), dtype=jnp.float32) * 0.5
    node_w = jax.random.uniform(kw, (B, N, 1), dtype=jnp.float32)

    # Evenly spaced directions on the unit circle (deterministic).
    thetas = jnp.linspace(0.0, 2.0 * jnp.pi, D, endpoint=False, dtype=jnp.float32)
    v = jnp.stack([jnp.cos(thetas), jnp.sin(thetas)], axis=0)            # (d, D)
    lin = jnp.linspace(-RADIUS, RADIUS, T, dtype=jnp.float32)[:, None]   # (T, 1)

    # Deterministic FC parameters (fc1: D*T -> hidden, fc2: hidden -> classes).
    F_in = D * T
    w1 = jax.random.normal(k1, (F_in, HIDDEN), dtype=jnp.float32) * 0.05
    b1 = jax.random.normal(kb1, (1, HIDDEN), dtype=jnp.float32) * 0.05
    w2 = jax.random.normal(k2, (HIDDEN, NUM_CLASSES), dtype=jnp.float32) * 0.05
    b2 = jax.random.normal(kb2, (1, NUM_CLASSES), dtype=jnp.float32) * 0.05

    out = wect_classifier(x, node_w, v, lin, SCALE, w1, b1, w2, b2)
    out = jax.block_until_ready(out)

    ref = ref_classifier(x, node_w, v, lin[:, 0], SCALE, w1, b1, w2, b2)
    assert out.shape == (B, NUM_CLASSES), out.shape
    assert jnp.allclose(out, ref, atol=2e-3, rtol=2e-3), (out, ref)

    print("KERNEL_OK")
</pallas_src>

<mosaic_0001>
module attributes {stable_mosaic.version = 11 : i64} {
  func.func @fused_wect_mlp_kernel(%arg0: i32, %arg1: memref<32x2xf32, #tpu.memory_space<vmem>>, %arg2: memref<2x32xf32, #tpu.memory_space<vmem>>, %arg3: memref<2x1xf32, #tpu.memory_space<vmem>>, %arg4: memref<2x128xf32, #tpu.memory_space<vmem>>, %arg5: memref<1x128xf32, #tpu.memory_space<vmem>>, %arg6: memref<128x128xf32, #tpu.memory_space<vmem>>, %arg7: memref<1x128xf32, #tpu.memory_space<vmem>>, %arg8: memref<128x128xf32, #tpu.memory_space<vmem>>, %arg9: memref<1x128xf32, #tpu.memory_space<vmem>>, %arg10: memref<2x128xf32, #tpu.memory_space<vmem>>) attributes {dimension_semantics = [#tpu.dimension_semantics<parallel>], iteration_bounds = array<i64: 1>, scalar_prefetch = 0 : i64, scratch_operands = 0 : i64, tpu.core_type = #tpu.core_type<tc>, window_params = [{transform_indices = @transform_0, window_bounds = array<i64: 32, 2>}, {transform_indices = @transform_1, window_bounds = array<i64: 2, 32>}, {transform_indices = @transform_2, window_bounds = array<i64: 2, 1>}, {pipeline_mode = #tpu.pipeline_mode<synchronous>, transform_indices = @transform_3, window_bounds = array<i64: 2, 128>}, {pipeline_mode = #tpu.pipeline_mode<synchronous>, transform_indices = @transform_4, window_bounds = array<i64: 1, 128>}, {pipeline_mode = #tpu.pipeline_mode<synchronous>, transform_indices = @transform_5, window_bounds = array<i64: 128, 128>}, {pipeline_mode = #tpu.pipeline_mode<synchronous>, transform_indices = @transform_6, window_bounds = array<i64: 1, 128>}, {pipeline_mode = #tpu.pipeline_mode<synchronous>, transform_indices = @transform_7, window_bounds = array<i64: 128, 128>}, {pipeline_mode = #tpu.pipeline_mode<synchronous>, transform_indices = @transform_8, window_bounds = array<i64: 1, 128>}, {transform_indices = @transform_9, window_bounds = array<i64: 2, 128>}]} {
    %c0 = arith.constant 0 : index
    %c0_0 = arith.constant 0 : index
    %0 = vector.load %arg1[%c0, %c0_0] : memref<32x2xf32, #tpu.memory_space<vmem>>, vector<32x1xf32>
    %c0_1 = arith.constant 0 : index
    %c0_2 = arith.constant 0 : index
    %1 = vector.load %arg4[%c0_1, %c0_2] : memref<2x128xf32, #tpu.memory_space<vmem>>, vector<1x128xf32>
    %2 = vector.broadcast %0 : vector<32x1xf32> to vector<32x128xf32>
    %3 = vector.broadcast %1 : vector<1x128xf32> to vector<32x128xf32>
    %4 = arith.mulf %2, %3 : vector<32x128xf32>
    %c0_3 = arith.constant 0 : index
    %c1 = arith.constant 1 : index
    %5 = vector.load %arg1[%c0_3, %c1] : memref<32x2xf32, #tpu.memory_space<vmem>>, vector<32x1xf32>
    %c1_4 = arith.constant 1 : index
    %c0_5 = arith.constant 0 : index
    %6 = vector.load %arg4[%c1_4, %c0_5] : memref<2x128xf32, #tpu.memory_space<vmem>>, vector<1x128xf32>
    %7 = vector.broadcast %5 : vector<32x1xf32> to vector<32x128xf32>
    %8 = vector.broadcast %6 : vector<1x128xf32> to vector<32x128xf32>
    %9 = arith.mulf %7, %8 : vector<32x128xf32>
    %10 = arith.addf %4, %9 : vector<32x128xf32>
    %c0_6 = arith.constant 0 : index
    %c0_7 = arith.constant 0 : index
    %11 = vector.load %arg5[%c0_6, %c0_7] : memref<1x128xf32, #tpu.memory_space<vmem>>, vector<1x128xf32>
    %12 = vector.broadcast %11 : vector<1x128xf32> to vector<32x128xf32>
    %13 = arith.addf %10, %12 : vector<32x128xf32>
    %14 = math.tanh %13 : vector<32x128xf32>
    %c0_8 = arith.constant 0 : index
    %c0_9 = arith.constant 0 : index
    %15 = vector.load %arg2[%c0_8, %c0_9] : memref<2x32xf32, #tpu.memory_space<vmem>>, vector<2x32xf32>
    %cst = arith.constant dense<0.000000e+00> : vector<2x128xf32>
    %16 = tpu.matmul %15, %14, %cst {dimension_numbers = #tpu.dot_dimension_numbers<[1], [0], [0], [1], [0, 0, 1, 1], [], []>} : vector<2x32xf32>, vector<32x128xf32>, vector<2x128xf32> -> vector<2x128xf32>
    %c0_10 = arith.constant 0 : index
    %c0_11 = arith.constant 0 : index
    %17 = vector.load %arg3[%c0_10, %c0_11] : memref<2x1xf32, #tpu.memory_space<vmem>>, vector<2x1xf32>
    %18 = vector.broadcast %17 : vector<2x1xf32> to vector<2x128xf32>
    %19 = arith.addf %16, %18 : vector<2x128xf32>
    %c0_12 = arith.constant 0 : index
    %c0_13 = arith.constant 0 : index
    %20 = vector.load %arg6[%c0_12, %c0_13] : memref<128x128xf32, #tpu.memory_space<vmem>>, vector<128x128xf32>
    %cst_14 = arith.constant dense<0.000000e+00> : vector<2x128xf32>
    %21 = tpu.matmul %19, %20, %cst_14 {dimension_numbers = #tpu.dot_dimension_numbers<[1], [0], [0], [1], [0, 0, 1, 1], [], []>} : vector<2x128xf32>, vector<128x128xf32>, vector<2x128xf32> -> vector<2x128xf32>
    %c0_15 = arith.constant 0 : index
    %c0_16 = arith.constant 0 : index
    %22 = vector.load %arg7[%c0_15, %c0_16] : memref<1x128xf32, #tpu.memory_space<vmem>>, vector<1x128xf32>
    %23 = vector.broadcast %22 : vector<1x128xf32> to vector<2x128xf32>
    %24 = arith.addf %21, %23 : vector<2x128xf32>
    %cst_17 = arith.constant 0.000000e+00 : f32
    %25 = vector.broadcast %cst_17 : f32 to vector<2x128xf32>
    %26 = arith.maximumf %24, %25 : vector<2x128xf32>
    %c0_18 = arith.constant 0 : index
    %c0_19 = arith.constant 0 : index
    %27 = vector.load %arg8[%c0_18, %c0_19] : memref<128x128xf32, #tpu.memory_space<vmem>>, vector<128x128xf32>
    %cst_20 = arith.constant dense<0.000000e+00> : vector<2x128xf32>
    %28 = tpu.matmul %26, %27, %cst_20 {dimension_numbers = #tpu.dot_dimension_numbers<[1], [0], [0], [1], [0, 0, 1, 1], [], []>} : vector<2x128xf32>, vector<128x128xf32>, vector<2x128xf32> -> vector<2x128xf32>
    %c0_21 = arith.constant 0 : index
    %c0_22 = arith.constant 0 : index
    %29 = vector.load %arg9[%c0_21, %c0_22] : memref<1x128xf32, #tpu.memory_space<vmem>>, vector<1x128xf32>
    %30 = vector.broadcast %29 : vector<1x128xf32> to vector<2x128xf32>
    %31 = arith.addf %28, %30 : vector<2x128xf32>
    %c0_23 = arith.constant 0 : index
    %c0_24 = arith.constant 0 : index
    %32 = vector.load %arg10[%c0_23, %c0_24] : memref<2x128xf32, #tpu.memory_space<vmem>>, vector<2x128xf32>
    tpu.vector_store %arg10[%c0_23, %c0_24], %31 {strides = array<i32>} : memref<2x128xf32, #tpu.memory_space<vmem>>, vector<2x128xf32>,
    return
  }
  func.func @transform_0(%arg0: i32) -> (i32, i32) {
    %c0_i32 = arith.constant 0 : i32
    %c0_i32_0 = arith.constant 0 : i32
    return %arg0, %c0_i32 : i32, i32
  }
  func.func @transform_1(%arg0: i32) -> (i32, i32) {
    %c0_i32 = arith.constant 0 : i32
    %c0_i32_0 = arith.constant 0 : i32
    return %arg0, %c0_i32 : i32, i32
  }
  func.func @transform_2(%arg0: i32) -> (i32, i32) {
    %c0_i32 = arith.constant 0 : i32
    %c0_i32_0 = arith.constant 0 : i32
    return %arg0, %c0_i32 : i32, i32
  }
  func.func @transform_3(%arg0: i32) -> (i32, i32) {
    %c0_i32 = arith.constant 0 : i32
    %c0_i32_0 = arith.constant 0 : i32
    %c0_i32_1 = arith.constant 0 : i32
    return %c0_i32, %c0_i32_0 : i32, i32
  }
  func.func @transform_4(%arg0: i32) -> (i32, i32) {
    %c0_i32 = arith.constant 0 : i32
    %c0_i32_0 = arith.constant 0 : i32
    %c0_i32_1 = arith.constant 0 : i32
    return %c0_i32, %c0_i32_0 : i32, i32
  }
  func.func @transform_5(%arg0: i32) -> (i32, i32) {
    %c0_i32 = arith.constant 0 : i32
    %c0_i32_0 = arith.constant 0 : i32
    %c0_i32_1 = arith.constant 0 : i32
    return %c0_i32, %c0_i32_0 : i32, i32
  }
  func.func @transform_6(%arg0: i32) -> (i32, i32) {
    %c0_i32 = arith.constant 0 : i32
    %c0_i32_0 = arith.constant 0 : i32
    %c0_i32_1 = arith.constant 0 : i32
    return %c0_i32, %c0_i32_0 : i32, i32
  }
  func.func @transform_7(%arg0: i32) -> (i32, i32) {
    %c0_i32 = arith.constant 0 : i32
    %c0_i32_0 = arith.constant 0 : i32
    %c0_i32_1 = arith.constant 0 : i32
    return %c0_i32, %c0_i32_0 : i32, i32
  }
  func.func @transform_8(%arg0: i32) -> (i32, i32) {
    %c0_i32 = arith.constant 0 : i32
    %c0_i32_0 = arith.constant 0 : i32
    %c0_i32_1 = arith.constant 0 : i32
    return %c0_i32, %c0_i32_0 : i32, i32
  }
  func.func @transform_9(%arg0: i32) -> (i32, i32) {
    %c0_i32 = arith.constant 0 : i32
    %c0_i32_0 = arith.constant 0 : i32
    return %arg0, %c0_i32 : i32, i32
  }
}

</mosaic_0001>

<llo_original>
// kernel: tpu_custom_call.1
$region0: #{tpu_custom_call.1}
  #allocation0 [shape = 'u32[]', space=smem, size = 0x4, offset = 0x4, fixed_abs, tag = 'smem constant byte address 0x4 - core index']
  #allocation1 [shape = 'u32[144,128]{1,0:T(1,128)}', space=vmem, size = 0x12000, scoped, tag = 'internal scratch']
  %s0 = inlined_call_operand.vmem [shape: f32[32,2], index: 0, kind: input, shape index: {}]
  %s1 = inlined_call_operand.vmem [shape: f32[2,32], index: 1, kind: input, shape index: {}]
  %s2 = inlined_call_operand.vmem [shape: f32[2,1], index: 2, kind: input, shape index: {}]
  %s3 = inlined_call_operand.vmem [shape: f32[2,128], index: 3, kind: input, shape index: {}]
  %s4 = inlined_call_operand.vmem [shape: f32[1,128], index: 4, kind: input, shape index: {}]
  %s5 = inlined_call_operand.hbm [shape: f32[128,128], index: 5, kind: input, shape index: {}]
  %s6 = inlined_call_operand.vmem [shape: f32[1,128], index: 6, kind: input, shape index: {}]
  %s7 = inlined_call_operand.hbm [shape: f32[128,128], index: 7, kind: input, shape index: {}]
  %s8 = inlined_call_operand.vmem [shape: f32[1,128], index: 8, kind: input, shape index: {}]
  %s9 = inlined_call_operand.hbm [shape: f32[2,128], index: 9, kind: output, shape index: {}]
  %s10 = sld [smem:[#allocation0]]
  $region54: #{tpu_custom_call.1} parent=0
    _
  %s12 = ssub.s32 1, %s10
  %s13 = scalar_select 0, %s12, %s10
  $region1: #{tpu_custom_call.1} parent=0
    #allocation2 [shape = 'u8[65536]{0}', space=vmem, size = 0x10000, scoped, tag = 'input window, operand 5, single buffered']
    #allocation3 [shape = 's32[1]{0}', space=sflag, size = 0x4, scoped, tag = 'scoped memory for tpu_custom_call.1']
    #allocation4 [shape = 's32[1]{0}', space=sflag, size = 0x4, scoped, tag = 'scoped memory for tpu_custom_call.1']
    #allocation5 [shape = 'u8[65536]{0}', space=vmem, size = 0x10000, scoped, tag = 'input window, operand 7, single buffered']
    #allocation6 [shape = 's32[1]{0}', space=sflag, size = 0x4, scoped, tag = 'scoped memory for tpu_custom_call.1']
    #allocation7 [shape = 'u8[1024]{0}', space=vmem, size = 0x400, scoped, tag = 'output window, operand 0, single buffered']
    %14 = vsyncpa [#allocation3], 0
    %15 = vsyncpa [#allocation6], 0
    %16 = vsyncpa [#allocation4], 0
    // Predicated region
    $region2: #{tpu_custom_call.1} parent=1 // pred_check
      _
    $region3: #{tpu_custom_call.1} parent=1 // pred_check_branch
      %18 = sbr.rel (0) target = $region5
    $region4: #{tpu_custom_call.1} parent=1 // pred_region
      _
    $region5: #{tpu_custom_call.1} parent=1 // pred_fallthru
      _
    // Predicated region
    $region6: #{tpu_custom_call.1} parent=1 // pred_check
      _
    $region7: #{tpu_custom_call.1} parent=1 // pred_check_branch
      %20 = sbr.rel (0) target = $region9
    $region8: #{tpu_custom_call.1} parent=1 // pred_region
      _
    $region9: #{tpu_custom_call.1} parent=1 // pred_fallthru
      _
    // Predicated region
    $region10: #{tpu_custom_call.1} parent=1 // pred_check
      _
    $region11: #{tpu_custom_call.1} parent=1 // pred_check_branch
      %22 = sbr.rel (0) target = $region13
    $region12: #{tpu_custom_call.1} parent=1 // pred_region
      _
    $region13: #{tpu_custom_call.1} parent=1 // pred_fallthru
      _
    // Predicated region
    $region14: #{tpu_custom_call.1} parent=1 // pred_check
      _
    $region15: #{tpu_custom_call.1} parent=1 // pred_check_branch
      %24 = sbr.rel (0) target = $region17
    $region16: #{tpu_custom_call.1} parent=1 // pred_region
      _
    $region17: #{tpu_custom_call.1} parent=1 // pred_fallthru
      _
    // Predicated region
    $region18: #{tpu_custom_call.1} parent=1 // pred_check
      _
    $region19: #{tpu_custom_call.1} parent=1 // pred_check_branch
      %26 = sbr.rel (0) target = $region21
    $region20: #{tpu_custom_call.1} parent=1 // pred_region
      _
    $region21: #{tpu_custom_call.1} parent=1 // pred_fallthru
      _
    // Predicated region
    $region22: #{tpu_custom_call.1} parent=1 // pred_check
      _
    $region23: #{tpu_custom_call.1} parent=1 // pred_check_branch
      %28 = sbr.rel (0) target = $region25
    $region24: #{tpu_custom_call.1} parent=1 // pred_region
      %s30 = ssub.s32 2048, 2048
      %31 = vsyncadd [#allocation3], %s30
      %s32 = sshll.u32 [#allocation2], 4
      %s33 = int_to_ptr.vmem [resolvable:$true] %s32
      %38 = dma.hbm_to_vmem [thread:$0]  %s5, 2048, %s33, [#allocation3], 128, 128, 8
    $region25: #{tpu_custom_call.1} parent=1 // pred_fallthru
      _
    // Predicated region
    $region26: #{tpu_custom_call.1} parent=1 // pred_check
      _
    $region27: #{tpu_custom_call.1} parent=1 // pred_check_branch
      %40 = sbr.rel (0) target = $region29
    $region28: #{tpu_custom_call.1} parent=1 // pred_region
      _
    $region29: #{tpu_custom_call.1} parent=1 // pred_fallthru
      _
    // Predicated region
    $region30: #{tpu_custom_call.1} parent=1 // pred_check
      _
    $region31: #{tpu_custom_call.1} parent=1 // pred_check_branch
      %42 = sbr.rel (0) target = $region33
    $region32: #{tpu_custom_call.1} parent=1 // pred_region
      %s44 = ssub.s32 2048, 2048
      %45 = vsyncadd [#allocation6], %s44
      %s46 = sshll.u32 [#allocation5], 4
      %s47 = int_to_ptr.vmem [resolvable:$true] %s46
      %52 = dma.hbm_to_vmem [thread:$0]  %s7, 2048, %s47, [#allocation6], 128, 128, 8
    $region33: #{tpu_custom_call.1} parent=1 // pred_fallthru
      _
    // Predicated region
    $region34: #{tpu_custom_call.1} parent=1 // pred_check
      _
    $region35: #{tpu_custom_call.1} parent=1 // pred_check_branch
      %54 = sbr.rel (0) target = $region37
    $region36: #{tpu_custom_call.1} parent=1 // pred_region
      _
    $region37: #{tpu_custom_call.1} parent=1 // pred_fallthru
      _
    // Predicated region
    $region38: #{tpu_custom_call.1} parent=1 // pred_check
      _
    $region39: #{tpu_custom_call.1} parent=1 // pred_check_branch
      %56 = sbr.rel (0) target = $region41
    $region40: #{tpu_custom_call.1} parent=1 // pred_region
      %57 = dma.done [#allocation3], 2048
    $region41: #{tpu_custom_call.1} parent=1 // pred_fallthru
      _
    // Predicated region
    $region42: #{tpu_custom_call.1} parent=1 // pred_check
      _
    $region43: #{tpu_custom_call.1} parent=1 // pred_check_branch
      %59 = sbr.rel (0) target = $region45
    $region44: #{tpu_custom_call.1} parent=1 // pred_region
      %60 = dma.done [#allocation6], 2048
    $region45: #{tpu_custom_call.1} parent=1 // pred_fallthru
      _
    %v61 = vld [vmem:[%s0] sm:$0xff]
    %v62 = vld [vmem:[%s0 + $0x8] sm:$0xff]
    %v63 = vld [vmem:[%s0 + $0x10] sm:$0xff]
    %v64 = vld [vmem:[%s0 + $0x18] sm:$0xff]
    %v65 = vld [vmem:[%s3] sm:$0x1]
    %67 = vset.pattern.permute.xlu0 0
    %68 = vperm.xlu0 %67, %v61
    %v69 = vpop.permute.xlu0 %68
    %72 = vset.pattern.permute.xlu0 0
    %73 = vperm.xlu0 %72, %v62
    %v74 = vpop.permute.xlu0 %73
    %77 = vset.pattern.permute.xlu0 0
    %78 = vperm.xlu0 %77, %v63
    %v79 = vpop.permute.xlu0 %78
    %82 = vset.pattern.permute.xlu0 0
    %83 = vperm.xlu0 %82, %v64
    %v84 = vpop.permute.xlu0 %83
    %v86 = vlaneseq
    %v87 = vshrl.u32 %v86, 7
    %v88 = vsub.s32 0, %v87
    %v89 = vrot.slane %v65, %v88
    %v90 = vmul.f32 %v69, %v89
    %v91 = vmul.f32 %v74, %v89
    %v92 = vmul.f32 %v79, %v89
    %v93 = vmul.f32 %v84, %v89
    %v94 = vld [vmem:[%s3 + $0x1] sm:$0x1]
    %95 = vset.pattern.permute.xlu0 1
    %96 = vperm.xlu0 %95, %v61
    %v97 = vpop.permute.xlu0 %96
    %99 = vset.pattern.permute.xlu0 1
    %100 = vperm.xlu0 %99, %v62
    %v101 = vpop.permute.xlu0 %100
    %103 = vset.pattern.permute.xlu0 1
    %104 = vperm.xlu0 %103, %v63
    %v105 = vpop.permute.xlu0 %104
    %107 = vset.pattern.permute.xlu0 1
    %108 = vperm.xlu0 %107, %v64
    %v109 = vpop.permute.xlu0 %108
    %v111 = vlaneseq
    %v112 = vshrl.u32 %v111, 7
    %v113 = vsub.s32 0, %v112
    %v114 = vrot.slane %v94, %v113
    %v115 = vmul.f32 %v97, %v114
    %v116 = vmul.f32 %v101, %v114
    %v117 = vmul.f32 %v105, %v114
    %v118 = vmul.f32 %v109, %v114
    %v119 = vadd.f32 %v90, %v115
    %v120 = vadd.f32 %v91, %v116
    %v121 = vadd.f32 %v92, %v117
    %v122 = vadd.f32 %v93, %v118
    %v123 = vld [vmem:[%s4] sm:$0x1]
    %v125 = vlaneseq
    %v126 = vshrl.u32 %v125, 7
    %v127 = vsub.s32 0, %v126
    %v128 = vrot.slane %v123, %v127
    %v130 = vadd.f32 %v119, %v128
    %v131 = vadd.f32 %v120, %v128
    %v132 = vadd.f32 %v121, %v128
    %v133 = vadd.f32 %v122, %v128
    %v134 = vtanh.pop %v130
    %v135 = vtanh.pop %v131
    %v136 = vtanh.pop %v132
    %v137 = vtanh.pop %v133
    %v138 = vld [vmem:[%s1] sm:$0x3]
    %v139 = vld [vmem:[%s2] sm:$0x3]
    %141 = vset.pattern.permute.xlu0 0
    %142 = vperm.xlu0 %141, %v139
    %v143 = vpop.permute.xlu0 %142
    %vm145 = vcmask 261120
    %v147 = vsel %vm145, %v138, 0
    %149 = vmatprep.subr.mxu0 0.0
    %150 = vmatpush1.msra.mxu0 0.0
    %151 = vmatprep.subr.mxu0 0.0
    %152 = vmatpush1.msra.mxu0 0.0
    %153 = vmatprep.subr.mxu0 0.0
    %154 = vmatpush1.msra.mxu0 0.0
    %155 = vmatprep.subr.mxu0 0.0
    %156 = vmatpush1.msra.mxu0 0.0
    %157 = vmatprep.subr.mxu0 0.0
    %158 = vmatpush1.msra.mxu0 0.0
    %159 = vmatprep.subr.mxu0 0.0
    %160 = vmatpush1.msra.mxu0 0.0
    %161 = vmatprep.subr.mxu0 0.0
    %162 = vmatpush1.msra.mxu0 0.0
    %163 = vmatprep.subr.mxu0 0.0
    %164 = vmatpush1.msra.mxu0 0.0
    %165 = vmatprep.subr.mxu0 0.0
    %166 = vmatpush1.msra.mxu0 0.0
    %167 = vmatprep.subr.mxu0 0.0
    %168 = vmatpush1.msra.mxu0 0.0
    %169 = vmatprep.subr.mxu0 0.0
    %170 = vmatpush1.msra.mxu0 0.0
    %171 = vmatprep.subr.mxu0 0.0
    %172 = vmatpush1.msra.mxu0 0.0
    %173 = vmatprep.subr.mxu0 0.0
    %174 = vmatpush1.msra.mxu0 %v137
    %175 = vmatprep.subr.mxu0 0.0
    %176 = vmatpush1.msra.mxu0 %v136
    %177 = vmatprep.subr.mxu0 0.0
    %178 = vmatpush1.msra.mxu0 %v135
    %179 = vmatprep.subr.mxu0 0.0
    %180 = vmatpush1.msra.mxu0 %v134
    %181 = vmatprep.subr.mxu0 0.0
    %182 = vmatpush2.msra.mxu0 0.0
    %183 = vmatprep.subr.mxu0 0.0
    %184 = vmatpush2.msra.mxu0 0.0
    %185 = vmatprep.subr.mxu0 0.0
    %186 = vmatpush2.msra.mxu0 0.0
    %187 = vmatprep.subr.mxu0 0.0
    %188 = vmatpush2.msra.mxu0 0.0
    %189 = vmatprep.subr.mxu0 0.0
    %190 = vmatpush2.msra.mxu0 0.0
    %191 = vmatprep.subr.mxu0 0.0
    %192 = vmatpush2.msra.mxu0 0.0
    %193 = vmatprep.subr.mxu0 0.0
    %194 = vmatpush2.msra.mxu0 0.0
    %195 = vmatprep.subr.mxu0 0.0
    %196 = vmatpush2.msra.mxu0 0.0
    %197 = vmatprep.subr.mxu0 0.0
    %198 = vmatpush2.msra.mxu0 0.0
    %199 = vmatprep.subr.mxu0 0.0
    %200 = vmatpush2.msra.mxu0 0.0
    %201 = vmatprep.subr.mxu0 0.0
    %202 = vmatpush2.msra.mxu0 0.0
    %203 = vmatprep.subr.mxu0 0.0
    %204 = vmatpush2.msra.mxu0 0.0
    %205 = vmatprep.subr.mxu0 0.0
    %206 = vmatpush2.msra.mxu0 0.0
    %207 = vmatprep.subr.mxu0 0.0
    %208 = vmatpush2.msra.mxu0 0.0
    %209 = vmatprep.subr.mxu0 0.0
    %210 = vmatpush2.msra.mxu0 0.0
    %211 = vmatprep.subr.mxu0 0.0
    %212 = vmatpush2.msra.mxu0 0.0
    %213 = vmatprep.mubr.f32.mxu0 0.0
    %214 = vmatmul.mubr.f32.gmra.mxu0 %v147
    %v215 = vpop.f32.mrf.mxu0
    %v216 = vadd.f32 %v143, %v215
    %v217 = vpop.f32.mrf.mxu0
    %218 = vdwg.mxu0
    %v219 = vld [vmem:[#allocation2] sm:$0xff]
    %v220 = vld [vmem:[#allocation2 + $0x8] sm:$0xff]
    %v221 = vld [vmem:[#allocation2 + $0x10] sm:$0xff]
    %v222 = vld [vmem:[#allocation2 + $0x18] sm:$0xff]
    %v223 = vld [vmem:[#allocation2 + $0x20] sm:$0xff]
    %v224 = vld [vmem:[#allocation2 + $0x28] sm:$0xff]
    %v225 = vld [vmem:[#allocation2 + $0x30] sm:$0xff]
    %v226 = vld [vmem:[#allocation2 + $0x38] sm:$0xff]
    %v227 = vld [vmem:[#allocation2 + $0x40] sm:$0xff]
    %v228 = vld [vmem:[#allocation2 + $0x48] sm:$0xff]
    %v229 = vld [vmem:[#allocation2 + $0x50] sm:$0xff]
    %v230 = vld [vmem:[#allocation2 + $0x58] sm:$0xff]
    %v231 = vld [vmem:[#allocation2 + $0x60] sm:$0xff]
    %v232 = vld [vmem:[#allocation2 + $0x68] sm:$0xff]
    %v233 = vld [vmem:[#allocation2 + $0x70] sm:$0xff]
    %v234 = vld [vmem:[#allocation2 + $0x78] sm:$0xff]
    %v235 = vld [vmem:[%s6] sm:$0x1]
    %v237 = vlaneseq
    %v238 = vshrl.u32 %v237, 7
    %v239 = vsub.s32 0, %v238
    %v240 = vrot.slane %v235, %v239
    %242 = vmatprep.subr.mxu0 0.0
    %243 = vmatpush1.msra.mxu0 %v234
    %244 = vmatprep.subr.mxu0 0.0
    %245 = vmatpush1.msra.mxu0 %v233
    %246 = vmatprep.subr.mxu0 0.0
    %247 = vmatpush1.msra.mxu0 %v232
    %248 = vmatprep.subr.mxu0 0.0
    %249 = vmatpush1.msra.mxu0 %v231
    %250 = vmatprep.subr.mxu0 0.0
    %251 = vmatpush1.msra.mxu0 %v230
    %252 = vmatprep.subr.mxu0 0.0
    %253 = vmatpush1.msra.mxu0 %v229
    %254 = vmatprep.subr.mxu0 0.0
    %255 = vmatpush1.msra.mxu0 %v228
    %256 = vmatprep.subr.mxu0 0.0
    %257 = vmatpush1.msra.mxu0 %v227
    %258 = vmatprep.subr.mxu0 0.0
    %259 = vmatpush1.msra.mxu0 %v226
    %260 = vmatprep.subr.mxu0 0.0
    %261 = vmatpush1.msra.mxu0 %v225
    %262 = vmatprep.subr.mxu0 0.0
    %263 = vmatpush1.msra.mxu0 %v224
    %264 = vmatprep.subr.mxu0 0.0
    %265 = vmatpush1.msra.mxu0 %v223
    %266 = vmatprep.subr.mxu0 0.0
    %267 = vmatpush1.msra.mxu0 %v222
    %268 = vmatprep.subr.mxu0 0.0
    %269 = vmatpush1.msra.mxu0 %v221
    %270 = vmatprep.subr.mxu0 0.0
    %271 = vmatpush1.msra.mxu0 %v220
    %272 = vmatprep.subr.mxu0 0.0
    %273 = vmatpush1.msra.mxu0 %v219
    %274 = vmatprep.subr.mxu0 0.0
    %275 = vmatpush2.msra.mxu0 0.0
    %276 = vmatprep.subr.mxu0 0.0
    %277 = vmatpush2.msra.mxu0 0.0
    %278 = vmatprep.subr.mxu0 0.0
    %279 = vmatpush2.msra.mxu0 0.0
    %280 = vmatprep.subr.mxu0 0.0
    %281 = vmatpush2.msra.mxu0 0.0
    %282 = vmatprep.subr.mxu0 0.0
    %283 = vmatpush2.msra.mxu0 0.0
    %284 = vmatprep.subr.mxu0 0.0
    %285 = vmatpush2.msra.mxu0 0.0
    %286 = vmatprep.subr.mxu0 0.0
    %287 = vmatpush2.msra.mxu0 0.0
    %288 = vmatprep.subr.mxu0 0.0
    %289 = vmatpush2.msra.mxu0 0.0
    %290 = vmatprep.subr.mxu0 0.0
    %291 = vmatpush2.msra.mxu0 0.0
    %292 = vmatprep.subr.mxu0 0.0
    %293 = vmatpush2.msra.mxu0 0.0
    %294 = vmatprep.subr.mxu0 0.0
    %295 = vmatpush2.msra.mxu0 0.0
    %296 = vmatprep.subr.mxu0 0.0
    %297 = vmatpush2.msra.mxu0 0.0
    %298 = vmatprep.subr.mxu0 0.0
    %299 = vmatpush2.msra.mxu0 0.0
    %300 = vmatprep.subr.mxu0 0.0
    %301 = vmatpush2.msra.mxu0 0.0
    %302 = vmatprep.subr.mxu0 0.0
    %303 = vmatpush2.msra.mxu0 0.0
    %304 = vmatprep.subr.mxu0 0.0
    %305 = vmatpush2.msra.mxu0 0.0
    %306 = vmatprep.mubr.f32.mxu0 0.0
    %307 = vmatmul.mubr.f32.gmra.mxu0 %v216
    %v308 = vpop.f32.mrf.mxu0
    %v309 = vadd.f32 %v240, %v308
    %v310 = vpop.f32.mrf.mxu0
    %311 = vdwg.mxu0
    %v312 = vmax.f32 %v309, 0.0
    %v313 = vld [vmem:[#allocation5] sm:$0xff]
    %v314 = vld [vmem:[#allocation5 + $0x8] sm:$0xff]
    %v315 = vld [vmem:[#allocation5 + $0x10] sm:$0xff]
    %v316 = vld [vmem:[#allocation5 + $0x18] sm:$0xff]
    %v317 = vld [vmem:[#allocation5 + $0x20] sm:$0xff]
    %v318 = vld [vmem:[#allocation5 + $0x28] sm:$0xff]
    %v319 = vld [vmem:[#allocation5 + $0x30] sm:$0xff]
    %v320 = vld [vmem:[#allocation5 + $0x38] sm:$0xff]
    %v321 = vld [vmem:[#allocation5 + $0x40] sm:$0xff]
    %v322 = vld [vmem:[#allocation5 + $0x48] sm:$0xff]
    %v323 = vld [vmem:[#allocation5 + $0x50] sm:$0xff]
    %v324 = vld [vmem:[#allocation5 + $0x58] sm:$0xff]
    %v325 = vld [vmem:[#allocation5 + $0x60] sm:$0xff]
    %v326 = vld [vmem:[#allocation5 + $0x68] sm:$0xff]
    %v327 = vld [vmem:[#allocation5 + $0x70] sm:$0xff]
    %v328 = vld [vmem:[#allocation5 + $0x78] sm:$0xff]
    %v329 = vld [vmem:[%s8] sm:$0x1]
    %v331 = vlaneseq
    %v332 = vshrl.u32 %v331, 7
    %v333 = vsub.s32 0, %v332
    %v334 = vrot.slane %v329, %v333
    %336 = vmatprep.subr.mxu0 0.0
    %337 = vmatpush1.msra.mxu0 %v328
    %338 = vmatprep.subr.mxu0 0.0
    %339 = vmatpush1.msra.mxu0 %v327
    %340 = vmatprep.subr.mxu0 0.0
    %341 = vmatpush1.msra.mxu0 %v326
    %342 = vmatprep.subr.mxu0 0.0
    %343 = vmatpush1.msra.mxu0 %v325
    %344 = vmatprep.subr.mxu0 0.0
    %345 = vmatpush1.msra.mxu0 %v324
    %346 = vmatprep.subr.mxu0 0.0
    %347 = vmatpush1.msra.mxu0 %v323
    %348 = vmatprep.subr.mxu0 0.0
    %349 = vmatpush1.msra.mxu0 %v322
    %350 = vmatprep.subr.mxu0 0.0
    %351 = vmatpush1.msra.mxu0 %v321
    %352 = vmatprep.subr.mxu0 0.0
    %353 = vmatpush1.msra.mxu0 %v320
    %354 = vmatprep.subr.mxu0 0.0
    %355 = vmatpush1.msra.mxu0 %v319
    %356 = vmatprep.subr.mxu0 0.0
    %357 = vmatpush1.msra.mxu0 %v318
    %358 = vmatprep.subr.mxu0 0.0
    %359 = vmatpush1.msra.mxu0 %v317
    %360 = vmatprep.subr.mxu0 0.0
    %361 = vmatpush1.msra.mxu0 %v316
    %362 = vmatprep.subr.mxu0 0.0
    %363 = vmatpush1.msra.mxu0 %v315
    %364 = vmatprep.subr.mxu0 0.0
    %365 = vmatpush1.msra.mxu0 %v314
    %366 = vmatprep.subr.mxu0 0.0
    %367 = vmatpush1.msra.mxu0 %v313
    %368 = vmatprep.subr.mxu0 0.0
    %369 = vmatpush2.msra.mxu0 0.0
    %370 = vmatprep.subr.mxu0 0.0
    %371 = vmatpush2.msra.mxu0 0.0
    %372 = vmatprep.subr.mxu0 0.0
    %373 = vmatpush2.msra.mxu0 0.0
    %374 = vmatprep.subr.mxu0 0.0
    %375 = vmatpush2.msra.mxu0 0.0
    %376 = vmatprep.subr.mxu0 0.0
    %377 = vmatpush2.msra.mxu0 0.0
    %378 = vmatprep.subr.mxu0 0.0
    %379 = vmatpush2.msra.mxu0 0.0
    %380 = vmatprep.subr.mxu0 0.0
    %381 = vmatpush2.msra.mxu0 0.0
    %382 = vmatprep.subr.mxu0 0.0
    %383 = vmatpush2.msra.mxu0 0.0
    %384 = vmatprep.subr.mxu0 0.0
    %385 = vmatpush2.msra.mxu0 0.0
    %386 = vmatprep.subr.mxu0 0.0
    %387 = vmatpush2.msra.mxu0 0.0
    %388 = vmatprep.subr.mxu0 0.0
    %389 = vmatpush2.msra.mxu0 0.0
    %390 = vmatprep.subr.mxu0 0.0
    %391 = vmatpush2.msra.mxu0 0.0
    %392 = vmatprep.subr.mxu0 0.0
    %393 = vmatpush2.msra.mxu0 0.0
    %394 = vmatprep.subr.mxu0 0.0
    %395 = vmatpush2.msra.mxu0 0.0
    %396 = vmatprep.subr.mxu0 0.0
    %397 = vmatpush2.msra.mxu0 0.0
    %398 = vmatprep.subr.mxu0 0.0
    %399 = vmatpush2.msra.mxu0 0.0
    %400 = vmatprep.mubr.f32.mxu0 0.0
    %401 = vmatmul.mubr.f32.gmra.mxu0 %v312
    %v402 = vpop.f32.mrf.mxu0
    %v403 = vadd.f32 %v334, %v402
    %v404 = vpop.f32.mrf.mxu0
    %405 = vdwg.mxu0
    %406 = vst [vmem:[#allocation7] sm:$0x3] %v403
    // Predicated region
    $region46: #{tpu_custom_call.1} parent=1 // pred_check
      _
    $region47: #{tpu_custom_call.1} parent=1 // pred_check_branch
      %408 = sbr.rel (0) target = $region49
    $region48: #{tpu_custom_call.1} parent=1 // pred_region
      %s410 = ssub.s32 32, 32
      %411 = vsyncadd [#allocation4], %s410
      %s413 = sshll.u32 [#allocation7], 4
      %s414 = int_to_ptr.vmem [resolvable:$true] %s413
      %416 = dma.vmem_to_hbm [thread:$0]  %s414, 32, %s9, [#allocation4]
    $region49: #{tpu_custom_call.1} parent=1 // pred_fallthru
      _
    // Predicated region
    $region50: #{tpu_custom_call.1} parent=1 // pred_check
      _
    $region51: #{tpu_custom_call.1} parent=1 // pred_check_branch
      %418 = sbr.rel (0) target = $region53
    $region52: #{tpu_custom_call.1} parent=1 // pred_region
      %419 = dma.done [#allocation4], 32
    $region53: #{tpu_custom_call.1} parent=1 // pred_fallthru
      _
    %420 = vsyncpa [#allocation3], 1
    %421 = vsyncpa [#allocation6], 1
    %422 = vsyncpa [#allocation4], 1

</llo_original>
